<compile_context>
chip_gen: v6e
topology: v6e:2x2x1
jax: 0.10.0
libtpu: 0.0.40
codegen_flags: <defaults>
</compile_context>

<pallas_src>
import functools

import jax
import jax.numpy as jnp
import numpy as np
from jax.experimental import pallas as pl
from jax.experimental.pallas import tpu as pltpu


# ---------------------------------------------------------------------------
# Kernel
# ---------------------------------------------------------------------------
def _make_kernel(cast_operands_to_f32):
    def kernel(x_ref, wt_ref, o_ref):
        # x_ref : (tm, indim)      fp16 (or f32 in the last-resort fallback)
        # wt_ref: (indim, out_w)   transposed weight, constant block -> resident
        # o_ref : (tm, out_w)
        x = x_ref[...]
        w = wt_ref[...]
        if cast_operands_to_f32:
            # Fallback path only: VPU extension of the resident tiles.
            x = x.astype(jnp.float32)
            w = w.astype(jnp.float32)
        acc = jnp.dot(x, w, preferred_element_type=jnp.float32)
        o_ref[...] = acc.astype(o_ref.dtype)

    return kernel


# ---------------------------------------------------------------------------
# Sizing helpers
# ---------------------------------------------------------------------------
def _round_up(n, m):
    return ((n + m - 1) // m) * m


@functools.lru_cache(maxsize=None)
def _vmem_limit_bytes():
    """Generation-aware scoped VMEM limit (v7x has 64 MiB physical, v5e/v6e 128)."""
    try:
        cap = pltpu.get_tpu_info().vmem_capacity_bytes
    except Exception:
        cap = 64 * 1024 * 1024  # conservative default (v7x-sized)
    if cap <= 96 * 1024 * 1024:          # v7x: 64 MiB per TensorCore
        return 48 * 1024 * 1024
    return 64 * 1024 * 1024              # v5e / v6e: 128 MiB


def _choose_tm(M, indim, out_w, vmem_limit):
    """Row-tile size from a VMEM byte budget (op is HBM-bound; big tiles amortize
    the ~0.35us per-grid-step pipeline overhead)."""
    # Approx. VMEM bytes per x-tile row across the pipeline:
    #   double-buffered 16-bit x rows + double-buffered 16-bit out rows
    #   + f32 accumulator / cast temporaries (worst case of the fallback kernel).
    per_row_bytes = 2 * (2 * indim) + 2 * (2 * out_w) + 4 * (indim + out_w)
    tile_rows = (vmem_limit // 3) // per_row_bytes        # leave ~2/3 headroom
    tm = max(512, (tile_rows // 512) * 512)               # multiple of 512: fp16
                                                          # sublanes + MXU widths
    # Keep >= 4 row blocks when M allows, so the "parallel" grid axis can be
    # sharded across v7x's two TensorCores.
    tm = min(tm, max(512, _round_up(pl.cdiv(M, 4), 512)))
    if tm >= M:
        tm = M                                            # single full-array block
    return tm


# ---------------------------------------------------------------------------
# pallas_call wrapper
# ---------------------------------------------------------------------------
def _lrk_matmul_2d(x2, wt, out_dtype, cast_operands_to_f32):
    """(M, indim) @ (indim, out_w) -> (M, out_w). No padded copy of x: the grid
    is cdiv(M, tm) and Pallas handles the ragged trailing block (padded reads,
    masked writes)."""
    M, indim = x2.shape
    out_w = wt.shape[1]
    vmem_limit = _vmem_limit_bytes()
    tm = _choose_tm(M, indim, out_w, vmem_limit)
    grid_m = pl.cdiv(M, tm)

    return pl.pallas_call(
        _make_kernel(cast_operands_to_f32),
        out_shape=jax.ShapeDtypeStruct((M, out_w), out_dtype),
        grid=(grid_m,),
        in_specs=[
            # Streaming input; double-buffered against compute by BlockSpec
            # pipelining.  (If a profile at large indim shows exposed DMA,
            # sweep pipeline_mode=pl.Buffered(3) here.)
            pl.BlockSpec((tm, indim), lambda i: (i, 0)),
            # Constant block index -> weight stays resident in VMEM.
            pl.BlockSpec((indim, out_w), lambda i: (0, 0)),
        ],
        out_specs=pl.BlockSpec((tm, out_w), lambda i: (i, 0)),
        compiler_params=pltpu.CompilerParams(
            dimension_semantics=("parallel",),   # shard row tiles across v7x's 2 TCs
            vmem_limit_bytes=vmem_limit,
        ),
    )(x2, wt)


# Strategy: 0 = 16-bit operands straight to the MXU (preferred),
#           1 = in-kernel f32 cast (if Mosaic rejects fp16 MXU operands),
#           2 = wrapper-level f32 cast (last resort; correctness over speed).
_STRATEGY = [None]


def _run_strategy(x2, wt, strategy):
    if strategy == 2:
        y = _lrk_matmul_2d(x2.astype(jnp.float32), wt.astype(jnp.float32),
                           jnp.float32, cast_operands_to_f32=False)
        return y.astype(x2.dtype)
    return _lrk_matmul_2d(x2, wt, x2.dtype,
                          cast_operands_to_f32=(strategy == 1))


def _dispatch(x2, wt):
    if _STRATEGY[0] is not None:
        return _run_strategy(x2, wt, _STRATEGY[0])
    # First (eager) call: probe strategies in order of preference and cache the
    # first one Mosaic accepts.  Lowering/compile errors surface as Python
    # exceptions when the pallas_call is executed eagerly.
    last_err = None
    for s in (0, 1, 2):
        try:
            out = _run_strategy(x2, wt, s)
            jax.block_until_ready(out)
            _STRATEGY[0] = s
            return out
        except Exception as e:  # Mosaic rejection (e.g. fp16 MXU operands)
            last_err = e
    raise last_err


# ---------------------------------------------------------------------------
# Public forward
# ---------------------------------------------------------------------------
_LANE = 128
_LANE_PAD_MIN_INDIM = 1024   # only lane-pad the output when the input stream dominates


def lrk_linear(x, weight):
    """y = x @ weight.T (no bias). x: (..., indim) fp16, weight: (outdim, indim) fp16."""
    outdim, indim = weight.shape
    lead = x.shape[:-1]
    x2 = x.reshape(-1, indim)          # stays fp16; no dtype change, no padded copy
    M = x2.shape[0]

    # One-time tiny transpose of the low-rank weight -> canonical (K, N) MXU feed.
    wt = weight.T                      # (indim, outdim)

    # Lane-dense output: outdim < 128 makes every output store a masked vst.msk
    # (worst on v5e's single vst slot).  Padding the *tiny* weight to 128 lanes
    # makes stores unmasked; only worth it when indim >> 128 so the extra output
    # bytes are small relative to the input stream.
    pad_lanes = (outdim < _LANE) and (indim >= _LANE_PAD_MIN_INDIM)
    if pad_lanes:
        wt = jnp.pad(wt, ((0, 0), (0, _LANE - outdim)))

    out2 = _dispatch(x2, wt)

    if pad_lanes:
        out2 = out2[:, :outdim]        # thin slice; fuses into downstream consumers
    return out2.reshape(*lead, outdim)


# ---------------------------------------------------------------------------
# Self-test
# ---------------------------------------------------------------------------
if __name__ == "__main__":
    key = jax.random.PRNGKey(0)
    k1, k2, k3, k4, k5, k6 = jax.random.split(key, 6)

    def ref_fn(x, w):
        return jnp.matmul(x.astype(jnp.float32),
                          w.astype(jnp.float32).T).astype(jnp.float16)

    def check(y, x, w):
        ref = ref_fn(x, w)
        np.testing.assert_allclose(np.asarray(y, np.float32),
                                   np.asarray(ref, np.float32),
                                   rtol=2e-2, atol=2e-2)

    # Case 1: module-scale 3-D activation, single resident block, skinny output.
    batch, seq, indim, outdim = 2, 8, 32, 16
    x1 = jax.random.normal(k1, (batch, seq, indim), jnp.float32).astype(jnp.float16)
    w1 = (0.1 * jax.random.normal(k2, (outdim, indim), jnp.float32)).astype(jnp.float16)
    y1 = jax.block_until_ready(lrk_linear(x1, w1))
    assert y1.shape == (batch, seq, outdim) and y1.dtype == jnp.float16
    check(y1, x1, w1)

    # Case 2: 2-D activation, multi-block grid with a ragged trailing block
    # (exercises the no-wrapper-pad path: grid = cdiv(M, tm)).
    M2, indim2, outdim2 = 1100, 32, 16
    x2 = jax.random.normal(k3, (M2, indim2), jnp.float32).astype(jnp.float16)
    w2 = (0.1 * jax.random.normal(k4, (outdim2, indim2), jnp.float32)).astype(jnp.float16)
    y2 = jax.block_until_ready(lrk_linear(x2, w2))
    assert y2.shape == (M2, outdim2) and y2.dtype == jnp.float16
    check(y2, x2, w2)

    # Case 3: wide-indim down-projection factor -> lane-dense (128-wide) output path.
    indim3, outdim3 = 1024, 16
    x3 = jax.random.normal(k5, (batch, seq, indim3), jnp.float32).astype(jnp.float16)
    w3 = (0.05 * jax.random.normal(k6, (outdim3, indim3), jnp.float32)).astype(jnp.float16)
    y3 = jax.block_until_ready(lrk_linear(x3, w3))
    assert y3.shape == (batch, seq, outdim3) and y3.dtype == jnp.float16
    check(y3, x3, w3)

    print("KERNEL_OK")
</pallas_src>

<mosaic_0001>
module attributes {stable_mosaic.version = 11 : i64} {
  func.func @kernel(%arg0: i32, %arg1: memref<16x32xf16, #tpu.memory_space<vmem>>, %arg2: memref<32x16xf16, #tpu.memory_space<vmem>>, %arg3: memref<16x16xf16, #tpu.memory_space<vmem>>) attributes {dimension_semantics = [#tpu.dimension_semantics<parallel>], iteration_bounds = array<i64: 1>, scalar_prefetch = 0 : i64, scratch_operands = 0 : i64, tpu.core_type = #tpu.core_type<tc>, window_params = [{transform_indices = @transform_0, window_bounds = array<i64: 16, 32>}, {pipeline_mode = #tpu.pipeline_mode<synchronous>, transform_indices = @transform_1, window_bounds = array<i64: 32, 16>}, {transform_indices = @transform_2, window_bounds = array<i64: 16, 16>}]} {
    %c0 = arith.constant 0 : index
    %c0_0 = arith.constant 0 : index
    %0 = vector.load %arg1[%c0, %c0_0] : memref<16x32xf16, #tpu.memory_space<vmem>>, vector<16x32xf16>
    %c0_1 = arith.constant 0 : index
    %c0_2 = arith.constant 0 : index
    %1 = vector.load %arg2[%c0_1, %c0_2] : memref<32x16xf16, #tpu.memory_space<vmem>>, vector<32x16xf16>
    %cst = arith.constant dense<0.000000e+00> : vector<16x16xf32>
    %2 = tpu.matmul %0, %1, %cst {dimension_numbers = #tpu.dot_dimension_numbers<[1], [0], [0], [1], [0, 0, 1, 1], [], []>} : vector<16x32xf16>, vector<32x16xf16>, vector<16x16xf32> -> vector<16x16xf32>
    %3 = arith.truncf %2 : vector<16x16xf32> to vector<16x16xf16>
    %c0_3 = arith.constant 0 : index
    %c0_4 = arith.constant 0 : index
    %4 = vector.load %arg3[%c0_3, %c0_4] : memref<16x16xf16, #tpu.memory_space<vmem>>, vector<16x16xf16>
    tpu.vector_store %arg3[%c0_3, %c0_4], %3 {strides = array<i32>} : memref<16x16xf16, #tpu.memory_space<vmem>>, vector<16x16xf16>,
    return
  }
  func.func @transform_0(%arg0: i32) -> (i32, i32) {
    %c0_i32 = arith.constant 0 : i32
    %c0_i32_0 = arith.constant 0 : i32
    return %arg0, %c0_i32 : i32, i32
  }
  func.func @transform_1(%arg0: i32) -> (i32, i32) {
    %c0_i32 = arith.constant 0 : i32
    %c0_i32_0 = arith.constant 0 : i32
    %c0_i32_1 = arith.constant 0 : i32
    return %c0_i32, %c0_i32_0 : i32, i32
  }
  func.func @transform_2(%arg0: i32) -> (i32, i32) {
    %c0_i32 = arith.constant 0 : i32
    %c0_i32_0 = arith.constant 0 : i32
    return %arg0, %c0_i32 : i32, i32
  }
}

module attributes {stable_mosaic.version = 11 : i64} {
  func.func @kernel(%arg0: i32, %arg1: memref<16x32xf16, #tpu.memory_space<vmem>>, %arg2: memref<32x16xf16, #tpu.memory_space<vmem>>, %arg3: memref<16x16xf16, #tpu.memory_space<vmem>>) attributes {dimension_semantics = [#tpu.dimension_semantics<parallel>], iteration_bounds = array<i64: 1>, scalar_prefetch = 0 : i64, scratch_operands = 0 : i64, tpu.core_type = #tpu.core_type<tc>, window_params = [{transform_indices = @transform_0, window_bounds = array<i64: 16, 32>}, {pipeline_mode = #tpu.pipeline_mode<synchronous>, transform_indices = @transform_1, window_bounds = array<i64: 32, 16>}, {transform_indices = @transform_2, window_bounds = array<i64: 16, 16>}]} {
    %c0 = arith.constant 0 : index
    %c0_0 = arith.constant 0 : index
    %0 = vector.load %arg1[%c0, %c0_0] : memref<16x32xf16, #tpu.memory_space<vmem>>, vector<16x32xf16>
    %c0_1 = arith.constant 0 : index
    %c0_2 = arith.constant 0 : index
    %1 = vector.load %arg2[%c0_1, %c0_2] : memref<32x16xf16, #tpu.memory_space<vmem>>, vector<32x16xf16>
    %2 = arith.extf %0 : vector<16x32xf16> to vector<16x32xf32>
    %3 = arith.extf %1 : vector<32x16xf16> to vector<32x16xf32>
    %cst = arith.constant dense<0.000000e+00> : vector<16x16xf32>
    %4 = tpu.matmul %2, %3, %cst {dimension_numbers = #tpu.dot_dimension_numbers<[1], [0], [0], [1], [0, 0, 1, 1], [], []>} : vector<16x32xf32>, vector<32x16xf32>, vector<16x16xf32> -> vector<16x16xf32>
    %5 = arith.truncf %4 : vector<16x16xf32> to vector<16x16xf16>
    %c0_3 = arith.constant 0 : index
    %c0_4 = arith.constant 0 : index
    %6 = vector.load %arg3[%c0_3, %c0_4] : memref<16x16xf16, #tpu.memory_space<vmem>>, vector<16x16xf16>
    tpu.vector_store %arg3[%c0_3, %c0_4], %5 {strides = array<i32>} : memref<16x16xf16, #tpu.memory_space<vmem>>, vector<16x16xf16>,
    return
  }
  func.func @transform_0(%arg0: i32) -> (i32, i32) {
    %c0_i32 = arith.constant 0 : i32
    %c0_i32_0 = arith.constant 0 : i32
    return %arg0, %c0_i32 : i32, i32
  }
  func.func @transform_1(%arg0: i32) -> (i32, i32) {
    %c0_i32 = arith.constant 0 : i32
    %c0_i32_0 = arith.constant 0 : i32
    %c0_i32_1 = arith.constant 0 : i32
    return %c0_i32, %c0_i32_0 : i32, i32
  }
  func.func @transform_2(%arg0: i32) -> (i32, i32) {
    %c0_i32 = arith.constant 0 : i32
    %c0_i32_0 = arith.constant 0 : i32
    return %arg0, %c0_i32 : i32, i32
  }
}

module attributes {stable_mosaic.version = 11 : i64} {
  func.func @kernel(%arg0: i32, %arg1: memref<16x32xf32, #tpu.memory_space<vmem>>, %arg2: memref<32x16xf32, #tpu.memory_space<vmem>>, %arg3: memref<16x16xf32, #tpu.memory_space<vmem>>) attributes {dimension_semantics = [#tpu.dimension_semantics<parallel>], iteration_bounds = array<i64: 1>, scalar_prefetch = 0 : i64, scratch_operands = 0 : i64, tpu.core_type = #tpu.core_type<tc>, window_params = [{transform_indices = @transform_0, window_bounds = array<i64: 16, 32>}, {pipeline_mode = #tpu.pipeline_mode<synchronous>, transform_indices = @transform_1, window_bounds = array<i64: 32, 16>}, {transform_indices = @transform_2, window_bounds = array<i64: 16, 16>}]} {
    %c0 = arith.constant 0 : index
    %c0_0 = arith.constant 0 : index
    %0 = vector.load %arg1[%c0, %c0_0] : memref<16x32xf32, #tpu.memory_space<vmem>>, vector<16x32xf32>
    %c0_1 = arith.constant 0 : index
    %c0_2 = arith.constant 0 : index
    %1 = vector.load %arg2[%c0_1, %c0_2] : memref<32x16xf32, #tpu.memory_space<vmem>>, vector<32x16xf32>
    %cst = arith.constant dense<0.000000e+00> : vector<16x16xf32>
    %2 = tpu.matmul %0, %1, %cst {dimension_numbers = #tpu.dot_dimension_numbers<[1], [0], [0], [1], [0, 0, 1, 1], [], []>} : vector<16x32xf32>, vector<32x16xf32>, vector<16x16xf32> -> vector<16x16xf32>
    %c0_3 = arith.constant 0 : index
    %c0_4 = arith.constant 0 : index
    %3 = vector.load %arg3[%c0_3, %c0_4] : memref<16x16xf32, #tpu.memory_space<vmem>>, vector<16x16xf32>
    tpu.vector_store %arg3[%c0_3, %c0_4], %2 {strides = array<i32>} : memref<16x16xf32, #tpu.memory_space<vmem>>, vector<16x16xf32>,
    return
  }
  func.func @transform_0(%arg0: i32) -> (i32, i32) {
    %c0_i32 = arith.constant 0 : i32
    %c0_i32_0 = arith.constant 0 : i32
    return %arg0, %c0_i32 : i32, i32
  }
  func.func @transform_1(%arg0: i32) -> (i32, i32) {
    %c0_i32 = arith.constant 0 : i32
    %c0_i32_0 = arith.constant 0 : i32
    %c0_i32_1 = arith.constant 0 : i32
    return %c0_i32, %c0_i32_0 : i32, i32
  }
  func.func @transform_2(%arg0: i32) -> (i32, i32) {
    %c0_i32 = arith.constant 0 : i32
    %c0_i32_0 = arith.constant 0 : i32
    return %arg0, %c0_i32 : i32, i32
  }
}

</mosaic_0001>

<llo_original>
// kernel: tpu_custom_call.1
$region0: #{tpu_custom_call.1}
  #allocation0 [shape = 'u32[]', space=smem, size = 0x4, offset = 0x4, fixed_abs, tag = 'smem constant byte address 0x4 - core index']
  #allocation1 [shape = 'u32[144,128]{1,0:T(1,128)}', space=vmem, size = 0x12000, scoped, tag = 'internal scratch']
  %s0 = inlined_call_operand.vmem [shape: f32[16,32], index: 0, kind: input, shape index: {}]
  %s1 = inlined_call_operand.vmem [shape: f32[32,16], index: 1, kind: input, shape index: {}]
  %s2 = inlined_call_operand.hbm [shape: f32[16,16], index: 2, kind: output, shape index: {}]
  %s3 = sld [smem:[#allocation0]]
  $region18: #{tpu_custom_call.1} parent=0
    _
  %s5 = ssub.s32 1, %s3
  %s6 = scalar_select 0, %s5, %s3
  $region1: #{tpu_custom_call.1} parent=0
    #allocation2 [shape = 'u8[8192]{0}', space=vmem, size = 0x2000, scoped, tag = 'output window, operand 0, single buffered']
    #allocation3 [shape = 's32[1]{0}', space=sflag, size = 0x4, scoped, tag = 'scoped memory for tpu_custom_call.1']
    %7 = vsyncpa [#allocation3], 0
    // Predicated region
    $region2: #{tpu_custom_call.1} parent=1 // pred_check
      _
    $region3: #{tpu_custom_call.1} parent=1 // pred_check_branch
      %9 = sbr.rel (0) target = $region5
    $region4: #{tpu_custom_call.1} parent=1 // pred_region
      _
    $region5: #{tpu_custom_call.1} parent=1 // pred_fallthru
      _
    // Predicated region
    $region6: #{tpu_custom_call.1} parent=1 // pred_check
      _
    $region7: #{tpu_custom_call.1} parent=1 // pred_check_branch
      %11 = sbr.rel (0) target = $region9
    $region8: #{tpu_custom_call.1} parent=1 // pred_region
      _
    $region9: #{tpu_custom_call.1} parent=1 // pred_fallthru
      _
    %v12 = vld [vmem:[%s0] sm:$0xff]
    %v13 = vld [vmem:[%s0 + $0x8] sm:$0xff]
    %v14 = vld [vmem:[%s1] sm:$0xff]
    %v15 = vld [vmem:[%s1 + $0x8] sm:$0xff]
    %v16 = vld [vmem:[%s1 + $0x10] sm:$0xff]
    %v17 = vld [vmem:[%s1 + $0x18] sm:$0xff]
    %vm18 = vcmask 261120
    %v20 = vsel %vm18, %v12, 0
    %v23 = vsel %vm18, %v13, 0
    %25 = vmatprep.subr.mxu0 0.0
    %26 = vmatpush1.msra.mxu0 0.0
    %27 = vmatprep.subr.mxu0 0.0
    %28 = vmatpush1.msra.mxu0 0.0
    %29 = vmatprep.subr.mxu0 0.0
    %30 = vmatpush1.msra.mxu0 0.0
    %31 = vmatprep.subr.mxu0 0.0
    %32 = vmatpush1.msra.mxu0 0.0
    %33 = vmatprep.subr.mxu0 0.0
    %34 = vmatpush1.msra.mxu0 0.0
    %35 = vmatprep.subr.mxu0 0.0
    %36 = vmatpush1.msra.mxu0 0.0
    %37 = vmatprep.subr.mxu0 0.0
    %38 = vmatpush1.msra.mxu0 0.0
    %39 = vmatprep.subr.mxu0 0.0
    %40 = vmatpush1.msra.mxu0 0.0
    %41 = vmatprep.subr.mxu0 0.0
    %42 = vmatpush1.msra.mxu0 0.0
    %43 = vmatprep.subr.mxu0 0.0
    %44 = vmatpush1.msra.mxu0 0.0
    %45 = vmatprep.subr.mxu0 0.0
    %46 = vmatpush1.msra.mxu0 0.0
    %47 = vmatprep.subr.mxu0 0.0
    %48 = vmatpush1.msra.mxu0 0.0
    %49 = vmatprep.subr.mxu0 0.0
    %50 = vmatpush1.msra.mxu0 %v17
    %51 = vmatprep.subr.mxu0 0.0
    %52 = vmatpush1.msra.mxu0 %v16
    %53 = vmatprep.subr.mxu0 0.0
    %54 = vmatpush1.msra.mxu0 %v15
    %55 = vmatprep.subr.mxu0 0.0
    %56 = vmatpush1.msra.mxu0 %v14
    %57 = vmatprep.subr.mxu0 0.0
    %58 = vmatpush2.msra.mxu0 0.0
    %59 = vmatprep.subr.mxu0 0.0
    %60 = vmatpush2.msra.mxu0 0.0
    %61 = vmatprep.subr.mxu0 0.0
    %62 = vmatpush2.msra.mxu0 0.0
    %63 = vmatprep.subr.mxu0 0.0
    %64 = vmatpush2.msra.mxu0 0.0
    %65 = vmatprep.subr.mxu0 0.0
    %66 = vmatpush2.msra.mxu0 0.0
    %67 = vmatprep.subr.mxu0 0.0
    %68 = vmatpush2.msra.mxu0 0.0
    %69 = vmatprep.subr.mxu0 0.0
    %70 = vmatpush2.msra.mxu0 0.0
    %71 = vmatprep.subr.mxu0 0.0
    %72 = vmatpush2.msra.mxu0 0.0
    %73 = vmatprep.subr.mxu0 0.0
    %74 = vmatpush2.msra.mxu0 0.0
    %75 = vmatprep.subr.mxu0 0.0
    %76 = vmatpush2.msra.mxu0 0.0
    %77 = vmatprep.subr.mxu0 0.0
    %78 = vmatpush2.msra.mxu0 0.0
    %79 = vmatprep.subr.mxu0 0.0
    %80 = vmatpush2.msra.mxu0 0.0
    %81 = vmatprep.subr.mxu0 0.0
    %82 = vmatpush2.msra.mxu0 0.0
    %83 = vmatprep.subr.mxu0 0.0
    %84 = vmatpush2.msra.mxu0 0.0
    %85 = vmatprep.subr.mxu0 0.0
    %86 = vmatpush2.msra.mxu0 0.0
    %87 = vmatprep.subr.mxu0 0.0
    %88 = vmatpush2.msra.mxu0 0.0
    %89 = vmatprep.mubr.f32.mxu0 0.0
    %90 = vmatmul.mubr.f32.gmra.mxu0 %v20
    %v91 = vpop.f32.mrf.mxu0
    %v92 = vadd.f32 0.0, %v91
    %v93 = vpop.f32.mrf.mxu0
    %94 = vmatprep.mubr.f32.mxu0 0.0
    %95 = vmatmul.mubr.f32.gmra.mxu0 %v23
    %v96 = vpop.f32.mrf.mxu0
    %v97 = vadd.f32 0.0, %v96
    %v98 = vpop.f32.mrf.mxu0
    %99 = vdwg.mxu0
    %vm100 = vcmask 130048
    %101 = vst.msk [vmem:[#allocation2] sm:$0xff] %vm100, %v92
    %102 = vst.msk [vmem:[#allocation2 + $0x8] sm:$0xff] %vm100, %v97
    // Predicated region
    $region10: #{tpu_custom_call.1} parent=1 // pred_check
      _
    $region11: #{tpu_custom_call.1} parent=1 // pred_check_branch
      %104 = sbr.rel (0) target = $region13
    $region12: #{tpu_custom_call.1} parent=1 // pred_region
      %s106 = ssub.s32 256, 256
      %107 = vsyncadd [#allocation3], %s106
      %s108 = sshll.u32 [#allocation2], 4
      %s109 = int_to_ptr.vmem [resolvable:$true] %s108
      %114 = dma.vmem_to_hbm [thread:$0]  %s109, 256, %s2, [#allocation3], 128, 128, 8
    $region13: #{tpu_custom_call.1} parent=1 // pred_fallthru
      _
    // Predicated region
    $region14: #{tpu_custom_call.1} parent=1 // pred_check
      _
    $region15: #{tpu_custom_call.1} parent=1 // pred_check_branch
      %116 = sbr.rel (0) target = $region17
    $region16: #{tpu_custom_call.1} parent=1 // pred_region
      %117 = dma.done [#allocation3], 256
    $region17: #{tpu_custom_call.1} parent=1 // pred_fallthru
      _
    %118 = vsyncpa [#allocation3], 1

</llo_original>
